<compile_context>
chip_gen: v5e
topology: v5e:2x2
jax: 0.10.0
libtpu: 0.0.40
codegen_flags: <defaults>
</compile_context>

<pallas_src>
import math
import functools

import jax
import jax.numpy as jnp
from jax.experimental import pallas as pl
from jax.experimental.pallas import tpu as pltpu


LANE = 128
MAX_TILE_B = 512   # review: 512 reaches ~85% of HBM roofline, fits v5e VMEM default


def _round_up(n, m):
    return ((n + m - 1) // m) * m


def _pick_tile_b(batch):
    """Static (trace-time) batch-tile selection.

    Small batches: pad only to the sublane granularity (16 covers f32 and bf16).
    Large batches: cap at MAX_TILE_B, but aim for >= 2 grid steps so the
    "parallel" batch axis actually shards across both TensorCores on v7x.
    """
    batch = max(int(batch), 1)
    if batch <= LANE:
        return _round_up(batch, 16)
    half = _round_up((batch + 1) // 2, LANE)
    return min(MAX_TILE_B, half)


def autoencoder_kernel(x_ref,
                       w1_ref, b1_ref,
                       w2_ref, b2_ref,
                       w3_ref, b3_ref,
                       w4_ref, b4_ref,
                       out_ref):
    # All four layers fused: intermediates never leave VMEM.  Matmuls run on
    # the MXU with f32 operands / f32 accumulation (kernel is HBM-bound on x,
    # so the extra MXU passes are free); bias add + ReLU on the VPU in f32.
    x = x_ref[...]

    h = jnp.dot(x, w1_ref[...], preferred_element_type=jnp.float32) + b1_ref[...]
    h = jnp.maximum(h, 0.0)

    h = jnp.dot(h, w2_ref[...], preferred_element_type=jnp.float32) + b2_ref[...]
    h = jnp.maximum(h, 0.0)

    h = jnp.dot(h, w3_ref[...], preferred_element_type=jnp.float32) + b3_ref[...]
    h = jnp.maximum(h, 0.0)

    out = jnp.dot(h, w4_ref[...], preferred_element_type=jnp.float32) + b4_ref[...]
    out_ref[...] = out.astype(out_ref.dtype)   # bf16 writeback (lane-dense)


def prepare_params(params):
    """One-time preparation: zero-pad every hidden/output dim up to a multiple
    of 128 lanes (weights stay f32).  Padded activation columns are exactly
    ReLU(0 + 0) = 0, so the math is unchanged.  Call once, reuse per forward."""
    w1, b1 = params["w1"], params["b1"]
    w2, b2 = params["w2"], params["b2"]
    w3, b3 = params["w3"], params["b3"]
    w4, b4 = params["w4"], params["b4"]

    d_in = w1.shape[0]
    d1p = _round_up(w1.shape[1], LANE)
    d2p = _round_up(w2.shape[1], LANE)
    d3p = _round_up(w3.shape[1], LANE)
    d4p = _round_up(w4.shape[1], LANE)

    def pad2(a, rows, cols):
        a = a.astype(jnp.float32)
        return jnp.pad(a, ((0, rows - a.shape[0]), (0, cols - a.shape[1])))

    return {
        "w1": pad2(w1, d_in, d1p), "b1": pad2(b1, 1, d1p),
        "w2": pad2(w2, d1p, d2p),  "b2": pad2(b2, 1, d2p),
        "w3": pad2(w3, d2p, d3p),  "b3": pad2(b3, 1, d3p),
        "w4": pad2(w4, d3p, d4p),  "b4": pad2(b4, 1, d4p),
    }


@functools.partial(jax.jit, static_argnames=("out_dim",))
def autoencoder_linear_forward(x, padded_params, *, out_dim):
    """x: (B, input_dim). padded_params: output of prepare_params()
    (pre-transposed, lane-padded f32 weights (in, out) and biases (1, out))."""
    w1, b1 = padded_params["w1"], padded_params["b1"]
    w2, b2 = padded_params["w2"], padded_params["b2"]
    w3, b3 = padded_params["w3"], padded_params["b3"]
    w4, b4 = padded_params["w4"], padded_params["b4"]

    B, d_in = x.shape
    d1, d2, d3, d4 = w1.shape[1], w2.shape[1], w3.shape[1], w4.shape[1]

    x = x.astype(jnp.float32)            # mirrors PyTorch's x.float(); no-op for f32

    # --- adaptive batch tiling ---
    tile_b = _pick_tile_b(B)
    b_pad = _round_up(max(B, 1), tile_b)
    if b_pad != B:
        x = jnp.pad(x, ((0, b_pad - B), (0, 0)))
    num_tiles = b_pad // tile_b

    # x / out tiled along batch; weights & biases resident (constant block index).
    resident = lambda i: (0, 0)
    in_specs = [
        pl.BlockSpec((tile_b, d_in), lambda i: (i, 0)),   # x tile (f32, dominant stream)
        pl.BlockSpec((d_in, d1), resident),               # w1
        pl.BlockSpec((1, d1), resident),                  # b1
        pl.BlockSpec((d1, d2), resident),                 # w2
        pl.BlockSpec((1, d2), resident),                  # b2
        pl.BlockSpec((d2, d3), resident),                 # w3
        pl.BlockSpec((1, d3), resident),                  # b3
        pl.BlockSpec((d3, d4), resident),                 # w4
        pl.BlockSpec((1, d4), resident),                  # b4
    ]
    out_specs = pl.BlockSpec((tile_b, d4), lambda i: (i, 0))

    flops = 2 * b_pad * (d_in * d1 + d1 * d2 + d2 * d3 + d3 * d4)
    bytes_accessed = (
        b_pad * d_in * 4                                        # x (f32)
        + sum(a.size * 4 for a in (w1, w2, w3, w4, b1, b2, b3, b4))
        + b_pad * d4 * 2                                        # out (bf16)
    )

    out_padded = pl.pallas_call(
        autoencoder_kernel,
        out_shape=jax.ShapeDtypeStruct((b_pad, d4), jnp.bfloat16),
        grid=(num_tiles,),
        in_specs=in_specs,
        out_specs=out_specs,
        compiler_params=pltpu.CompilerParams(
            dimension_semantics=("parallel",),
        ),
        cost_estimate=pl.CostEstimate(
            flops=flops, transcendentals=0, bytes_accessed=bytes_accessed),
    )(x, w1, b1, w2, b2, w3, b3, w4, b4)

    # NOTE: padded batch rows / padded output columns are garbage/zero and are
    # sliced off here; do not reuse the padded buffer directly.
    return out_padded[:B, :out_dim].astype(jnp.float32)


def init_params(key, encoding_dim, input_dim=784, output_dim=10):
    """PyTorch nn.Linear-style init (U[-1/sqrt(fan_in), +1/sqrt(fan_in)]).
    Weights stored transposed: (in_features, out_features); biases (1, out)."""
    dims = [(input_dim, encoding_dim * 4),
            (encoding_dim * 4, encoding_dim * 2),
            (encoding_dim * 2, encoding_dim),
            (encoding_dim, output_dim)]
    params = {}
    for i, (fan_in, fan_out) in enumerate(dims, start=1):
        key, kw, kb = jax.random.split(key, 3)
        bound = 1.0 / math.sqrt(fan_in)
        params[f"w{i}"] = jax.random.uniform(
            kw, (fan_in, fan_out), jnp.float32, minval=-bound, maxval=bound)
        params[f"b{i}"] = jax.random.uniform(
            kb, (1, fan_out), jnp.float32, minval=-bound, maxval=bound)
    return params


def reference_forward(x, params):
    h = x.astype(jnp.float32)
    h = jnp.maximum(h @ params["w1"] + params["b1"], 0.0)
    h = jnp.maximum(h @ params["w2"] + params["b2"], 0.0)
    h = jnp.maximum(h @ params["w3"] + params["b3"], 0.0)
    return h @ params["w4"] + params["b4"]


if __name__ == "__main__":
    key = jax.random.PRNGKey(0)
    k_x, k_p = jax.random.split(key)

    batch = 8
    encoding_dim = 32
    input_dim = 784
    output_dim = 10

    x = jax.random.normal(k_x, (batch, input_dim), jnp.float32)
    params = init_params(k_p, encoding_dim, input_dim, output_dim)
    padded_params = prepare_params(params)   # one-time pad/cast, reused per call

    out = autoencoder_linear_forward(x, padded_params, out_dim=output_dim)
    out = jax.block_until_ready(out)

    ref = reference_forward(x, params)
    assert out.shape == (batch, output_dim), out.shape
    # f32 weights/accumulation; bf16 output writeback -> small tolerance.
    assert jnp.allclose(out, ref, atol=2e-2, rtol=2e-2), \
        float(jnp.max(jnp.abs(out - ref)))

    print("KERNEL_OK")
</pallas_src>

<mosaic_0001>
module attributes {stable_mosaic.version = 11 : i64} {
  func.func @autoencoder_kernel(%arg0: i32, %arg1: memref<16x784xf32, #tpu.memory_space<vmem>>, %arg2: memref<784x128xf32, #tpu.memory_space<vmem>>, %arg3: memref<1x128xf32, #tpu.memory_space<vmem>>, %arg4: memref<128x128xf32, #tpu.memory_space<vmem>>, %arg5: memref<1x128xf32, #tpu.memory_space<vmem>>, %arg6: memref<128x128xf32, #tpu.memory_space<vmem>>, %arg7: memref<1x128xf32, #tpu.memory_space<vmem>>, %arg8: memref<128x128xf32, #tpu.memory_space<vmem>>, %arg9: memref<1x128xf32, #tpu.memory_space<vmem>>, %arg10: memref<16x128xbf16, #tpu.memory_space<vmem>>) attributes {dimension_semantics = [#tpu.dimension_semantics<parallel>], iteration_bounds = array<i64: 1>, scalar_prefetch = 0 : i64, scratch_operands = 0 : i64, tpu.core_type = #tpu.core_type<tc>, window_params = [{transform_indices = @transform_0, window_bounds = array<i64: 16, 784>}, {pipeline_mode = #tpu.pipeline_mode<synchronous>, transform_indices = @transform_1, window_bounds = array<i64: 784, 128>}, {pipeline_mode = #tpu.pipeline_mode<synchronous>, transform_indices = @transform_2, window_bounds = array<i64: 1, 128>}, {pipeline_mode = #tpu.pipeline_mode<synchronous>, transform_indices = @transform_3, window_bounds = array<i64: 128, 128>}, {pipeline_mode = #tpu.pipeline_mode<synchronous>, transform_indices = @transform_4, window_bounds = array<i64: 1, 128>}, {pipeline_mode = #tpu.pipeline_mode<synchronous>, transform_indices = @transform_5, window_bounds = array<i64: 128, 128>}, {pipeline_mode = #tpu.pipeline_mode<synchronous>, transform_indices = @transform_6, window_bounds = array<i64: 1, 128>}, {pipeline_mode = #tpu.pipeline_mode<synchronous>, transform_indices = @transform_7, window_bounds = array<i64: 128, 128>}, {pipeline_mode = #tpu.pipeline_mode<synchronous>, transform_indices = @transform_8, window_bounds = array<i64: 1, 128>}, {transform_indices = @transform_9, window_bounds = array<i64: 16, 128>}]} {
    %c0 = arith.constant 0 : index
    %c0_0 = arith.constant 0 : index
    %0 = vector.load %arg1[%c0, %c0_0] : memref<16x784xf32, #tpu.memory_space<vmem>>, vector<16x784xf32>
    %c0_1 = arith.constant 0 : index
    %c0_2 = arith.constant 0 : index
    %1 = vector.load %arg2[%c0_1, %c0_2] : memref<784x128xf32, #tpu.memory_space<vmem>>, vector<784x128xf32>
    %cst = arith.constant dense<0.000000e+00> : vector<16x128xf32>
    %2 = tpu.matmul %0, %1, %cst {dimension_numbers = #tpu.dot_dimension_numbers<[1], [0], [0], [1], [0, 0, 1, 1], [], []>} : vector<16x784xf32>, vector<784x128xf32>, vector<16x128xf32> -> vector<16x128xf32>
    %c0_3 = arith.constant 0 : index
    %c0_4 = arith.constant 0 : index
    %3 = vector.load %arg3[%c0_3, %c0_4] : memref<1x128xf32, #tpu.memory_space<vmem>>, vector<1x128xf32>
    %4 = vector.broadcast %3 : vector<1x128xf32> to vector<16x128xf32>
    %5 = arith.addf %2, %4 : vector<16x128xf32>
    %cst_5 = arith.constant 0.000000e+00 : f32
    %6 = vector.broadcast %cst_5 : f32 to vector<16x128xf32>
    %7 = arith.maximumf %5, %6 : vector<16x128xf32>
    %c0_6 = arith.constant 0 : index
    %c0_7 = arith.constant 0 : index
    %8 = vector.load %arg4[%c0_6, %c0_7] : memref<128x128xf32, #tpu.memory_space<vmem>>, vector<128x128xf32>
    %cst_8 = arith.constant dense<0.000000e+00> : vector<16x128xf32>
    %9 = tpu.matmul %7, %8, %cst_8 {dimension_numbers = #tpu.dot_dimension_numbers<[1], [0], [0], [1], [0, 0, 1, 1], [], []>} : vector<16x128xf32>, vector<128x128xf32>, vector<16x128xf32> -> vector<16x128xf32>
    %c0_9 = arith.constant 0 : index
    %c0_10 = arith.constant 0 : index
    %10 = vector.load %arg5[%c0_9, %c0_10] : memref<1x128xf32, #tpu.memory_space<vmem>>, vector<1x128xf32>
    %11 = vector.broadcast %10 : vector<1x128xf32> to vector<16x128xf32>
    %12 = arith.addf %9, %11 : vector<16x128xf32>
    %cst_11 = arith.constant 0.000000e+00 : f32
    %13 = vector.broadcast %cst_11 : f32 to vector<16x128xf32>
    %14 = arith.maximumf %12, %13 : vector<16x128xf32>
    %c0_12 = arith.constant 0 : index
    %c0_13 = arith.constant 0 : index
    %15 = vector.load %arg6[%c0_12, %c0_13] : memref<128x128xf32, #tpu.memory_space<vmem>>, vector<128x128xf32>
    %cst_14 = arith.constant dense<0.000000e+00> : vector<16x128xf32>
    %16 = tpu.matmul %14, %15, %cst_14 {dimension_numbers = #tpu.dot_dimension_numbers<[1], [0], [0], [1], [0, 0, 1, 1], [], []>} : vector<16x128xf32>, vector<128x128xf32>, vector<16x128xf32> -> vector<16x128xf32>
    %c0_15 = arith.constant 0 : index
    %c0_16 = arith.constant 0 : index
    %17 = vector.load %arg7[%c0_15, %c0_16] : memref<1x128xf32, #tpu.memory_space<vmem>>, vector<1x128xf32>
    %18 = vector.broadcast %17 : vector<1x128xf32> to vector<16x128xf32>
    %19 = arith.addf %16, %18 : vector<16x128xf32>
    %cst_17 = arith.constant 0.000000e+00 : f32
    %20 = vector.broadcast %cst_17 : f32 to vector<16x128xf32>
    %21 = arith.maximumf %19, %20 : vector<16x128xf32>
    %c0_18 = arith.constant 0 : index
    %c0_19 = arith.constant 0 : index
    %22 = vector.load %arg8[%c0_18, %c0_19] : memref<128x128xf32, #tpu.memory_space<vmem>>, vector<128x128xf32>
    %cst_20 = arith.constant dense<0.000000e+00> : vector<16x128xf32>
    %23 = tpu.matmul %21, %22, %cst_20 {dimension_numbers = #tpu.dot_dimension_numbers<[1], [0], [0], [1], [0, 0, 1, 1], [], []>} : vector<16x128xf32>, vector<128x128xf32>, vector<16x128xf32> -> vector<16x128xf32>
    %c0_21 = arith.constant 0 : index
    %c0_22 = arith.constant 0 : index
    %24 = vector.load %arg9[%c0_21, %c0_22] : memref<1x128xf32, #tpu.memory_space<vmem>>, vector<1x128xf32>
    %25 = vector.broadcast %24 : vector<1x128xf32> to vector<16x128xf32>
    %26 = arith.addf %23, %25 : vector<16x128xf32>
    %27 = arith.truncf %26 : vector<16x128xf32> to vector<16x128xbf16>
    %c0_23 = arith.constant 0 : index
    %c0_24 = arith.constant 0 : index
    %28 = vector.load %arg10[%c0_23, %c0_24] : memref<16x128xbf16, #tpu.memory_space<vmem>>, vector<16x128xbf16>
    tpu.vector_store %arg10[%c0_23, %c0_24], %27 {strides = array<i32>} : memref<16x128xbf16, #tpu.memory_space<vmem>>, vector<16x128xbf16>,
    return
  }
  func.func @transform_0(%arg0: i32) -> (i32, i32) {
    %c0_i32 = arith.constant 0 : i32
    %c0_i32_0 = arith.constant 0 : i32
    return %arg0, %c0_i32 : i32, i32
  }
  func.func @transform_1(%arg0: i32) -> (i32, i32) {
    %c0_i32 = arith.constant 0 : i32
    %c0_i32_0 = arith.constant 0 : i32
    %c0_i32_1 = arith.constant 0 : i32
    return %c0_i32, %c0_i32_0 : i32, i32
  }
  func.func @transform_2(%arg0: i32) -> (i32, i32) {
    %c0_i32 = arith.constant 0 : i32
    %c0_i32_0 = arith.constant 0 : i32
    %c0_i32_1 = arith.constant 0 : i32
    return %c0_i32, %c0_i32_0 : i32, i32
  }
  func.func @transform_3(%arg0: i32) -> (i32, i32) {
    %c0_i32 = arith.constant 0 : i32
    %c0_i32_0 = arith.constant 0 : i32
    %c0_i32_1 = arith.constant 0 : i32
    return %c0_i32, %c0_i32_0 : i32, i32
  }
  func.func @transform_4(%arg0: i32) -> (i32, i32) {
    %c0_i32 = arith.constant 0 : i32
    %c0_i32_0 = arith.constant 0 : i32
    %c0_i32_1 = arith.constant 0 : i32
    return %c0_i32, %c0_i32_0 : i32, i32
  }
  func.func @transform_5(%arg0: i32) -> (i32, i32) {
    %c0_i32 = arith.constant 0 : i32
    %c0_i32_0 = arith.constant 0 : i32
    %c0_i32_1 = arith.constant 0 : i32
    return %c0_i32, %c0_i32_0 : i32, i32
  }
  func.func @transform_6(%arg0: i32) -> (i32, i32) {
    %c0_i32 = arith.constant 0 : i32
    %c0_i32_0 = arith.constant 0 : i32
    %c0_i32_1 = arith.constant 0 : i32
    return %c0_i32, %c0_i32_0 : i32, i32
  }
  func.func @transform_7(%arg0: i32) -> (i32, i32) {
    %c0_i32 = arith.constant 0 : i32
    %c0_i32_0 = arith.constant 0 : i32
    %c0_i32_1 = arith.constant 0 : i32
    return %c0_i32, %c0_i32_0 : i32, i32
  }
  func.func @transform_8(%arg0: i32) -> (i32, i32) {
    %c0_i32 = arith.constant 0 : i32
    %c0_i32_0 = arith.constant 0 : i32
    %c0_i32_1 = arith.constant 0 : i32
    return %c0_i32, %c0_i32_0 : i32, i32
  }
  func.func @transform_9(%arg0: i32) -> (i32, i32) {
    %c0_i32 = arith.constant 0 : i32
    %c0_i32_0 = arith.constant 0 : i32
    return %arg0, %c0_i32 : i32, i32
  }
}

</mosaic_0001>

<llo_original>
// kernel: autoencoder_linear_forward.1
$region0: #{autoencoder_linear_forward.1}
  #allocation0 [shape = 'u32[]', space=smem, size = 0x4, offset = 0x4, fixed_abs, tag = 'smem constant byte address 0x4 - core index']
  #allocation1 [shape = 'u32[72,128]{1,0:T(1,128)}', space=vmem, size = 0x9000, scoped, tag = 'internal scratch']
  %s0 = inlined_call_operand.vmem [shape: f32[16,784], index: 0, kind: input, shape index: {}]
  %s1 = inlined_call_operand.hbm [shape: f32[784,128], index: 1, kind: input, shape index: {}]
  %s2 = inlined_call_operand.vmem [shape: f32[1,128], index: 2, kind: input, shape index: {}]
  %s3 = inlined_call_operand.vmem [shape: f32[128,128], index: 3, kind: input, shape index: {}]
  %s4 = inlined_call_operand.vmem [shape: f32[1,128], index: 4, kind: input, shape index: {}]
  %s5 = inlined_call_operand.hbm [shape: f32[128,128], index: 5, kind: input, shape index: {}]
  %s6 = inlined_call_operand.vmem [shape: f32[1,128], index: 6, kind: input, shape index: {}]
  %s7 = inlined_call_operand.hbm [shape: f32[128,128], index: 7, kind: input, shape index: {}]
  %s8 = inlined_call_operand.vmem [shape: f32[1,128], index: 8, kind: input, shape index: {}]
  %s9 = inlined_call_operand.vmem [shape: bf16[16,128], index: 9, kind: output, shape index: {}]
  %s10 = sld [smem:[#allocation0]]
  $region58: #{autoencoder_linear_forward.1} parent=0
    _
  %s12 = ssub.s32 1, %s10
  %s13 = scalar_select 0, %s12, %s10
  $region1: #{autoencoder_linear_forward.1} parent=0
    #allocation2 [shape = 'u8[401408]{0}', space=vmem, size = 0x62000, scoped, tag = 'input window, operand 1, single buffered']
    #allocation3 [shape = 's32[1]{0}', space=sflag, size = 0x4, scoped, tag = 'scoped memory for autoencoder_linear_forward.1']
    #allocation4 [shape = 'u8[65536]{0}', space=vmem, size = 0x10000, scoped, tag = 'input window, operand 5, single buffered']
    #allocation5 [shape = 's32[1]{0}', space=sflag, size = 0x4, scoped, tag = 'scoped memory for autoencoder_linear_forward.1']
    #allocation6 [shape = 'u8[65536]{0}', space=vmem, size = 0x10000, scoped, tag = 'input window, operand 7, single buffered']
    %14 = vsyncpa [#allocation3], 0
    %15 = vsyncpa [#allocation5], 0
    // Predicated region
    $region2: #{autoencoder_linear_forward.1} parent=1 // pred_check
      _
    $region3: #{autoencoder_linear_forward.1} parent=1 // pred_check_branch
      %17 = sbr.rel (0) target = $region5
    $region4: #{autoencoder_linear_forward.1} parent=1 // pred_region
      _
    $region5: #{autoencoder_linear_forward.1} parent=1 // pred_fallthru
      _
    // Predicated region
    $region6: #{autoencoder_linear_forward.1} parent=1 // pred_check
      _
    $region7: #{autoencoder_linear_forward.1} parent=1 // pred_check_branch
      %19 = sbr.rel (0) target = $region9
    $region8: #{autoencoder_linear_forward.1} parent=1 // pred_region
      %21 = vsyncadd [#allocation3], 0
      %s22 = sshll.u32 %s1, 4
      %s23 = int_to_ptr.hbm [resolvable:$true] %s22
      %s24 = sshll.u32 [#allocation2], 4
      %s25 = int_to_ptr.vmem [resolvable:$true] %s24
      %30 = dma.hbm_to_vmem [thread:$0]  %s23, 12544, %s25, [#allocation3], 128, 128, 8
    $region9: #{autoencoder_linear_forward.1} parent=1 // pred_fallthru
      _
    // Predicated region
    $region10: #{autoencoder_linear_forward.1} parent=1 // pred_check
      _
    $region11: #{autoencoder_linear_forward.1} parent=1 // pred_check_branch
      %32 = sbr.rel (0) target = $region13
    $region12: #{autoencoder_linear_forward.1} parent=1 // pred_region
      _
    $region13: #{autoencoder_linear_forward.1} parent=1 // pred_fallthru
      _
    // Predicated region
    $region14: #{autoencoder_linear_forward.1} parent=1 // pred_check
      _
    $region15: #{autoencoder_linear_forward.1} parent=1 // pred_check_branch
      %34 = sbr.rel (0) target = $region17
    $region16: #{autoencoder_linear_forward.1} parent=1 // pred_region
      _
    $region17: #{autoencoder_linear_forward.1} parent=1 // pred_fallthru
      _
    // Predicated region
    $region18: #{autoencoder_linear_forward.1} parent=1 // pred_check
      _
    $region19: #{autoencoder_linear_forward.1} parent=1 // pred_check_branch
      %36 = sbr.rel (0) target = $region21
    $region20: #{autoencoder_linear_forward.1} parent=1 // pred_region
      _
    $region21: #{autoencoder_linear_forward.1} parent=1 // pred_fallthru
      _
    // Predicated region
    $region22: #{autoencoder_linear_forward.1} parent=1 // pred_check
      _
    $region23: #{autoencoder_linear_forward.1} parent=1 // pred_check_branch
      %38 = sbr.rel (0) target = $region25
    $region24: #{autoencoder_linear_forward.1} parent=1 // pred_region
      %40 = vsyncadd [#allocation5], 0
      %s41 = sshll.u32 %s5, 4
      %s42 = int_to_ptr.hbm [resolvable:$true] %s41
      %s43 = sshll.u32 [#allocation4], 4
      %s44 = int_to_ptr.vmem [resolvable:$true] %s43
      %49 = dma.hbm_to_vmem [thread:$0]  %s42, 2048, %s44, [#allocation5], 128, 128, 8
    $region25: #{autoencoder_linear_forward.1} parent=1 // pred_fallthru
      _
    // Predicated region
    $region26: #{autoencoder_linear_forward.1} parent=1 // pred_check
      _
    $region27: #{autoencoder_linear_forward.1} parent=1 // pred_check_branch
      %51 = sbr.rel (0) target = $region29
    $region28: #{autoencoder_linear_forward.1} parent=1 // pred_region
      _
    $region29: #{autoencoder_linear_forward.1} parent=1 // pred_fallthru
      _
    // Predicated region
    $region30: #{autoencoder_linear_forward.1} parent=1 // pred_check
      _
    $region31: #{autoencoder_linear_forward.1} parent=1 // pred_check_branch
      %53 = sbr.rel (0) target = $region33
    $region32: #{autoencoder_linear_forward.1} parent=1 // pred_region
      %55 = vsyncadd [#allocation5], 0
      %s56 = sshll.u32 %s7, 4
      %s57 = int_to_ptr.hbm [resolvable:$true] %s56
      %s58 = sshll.u32 [#allocation6], 4
      %s59 = int_to_ptr.vmem [resolvable:$true] %s58
      %64 = dma.hbm_to_vmem [thread:$0]  %s57, 2048, %s59, [#allocation5], 128, 128, 8
    $region33: #{autoencoder_linear_forward.1} parent=1 // pred_fallthru
      _
    // Predicated region
    $region34: #{autoencoder_linear_forward.1} parent=1 // pred_check
      _
    $region35: #{autoencoder_linear_forward.1} parent=1 // pred_check_branch
      %66 = sbr.rel (0) target = $region37
    $region36: #{autoencoder_linear_forward.1} parent=1 // pred_region
      _
    $region37: #{autoencoder_linear_forward.1} parent=1 // pred_fallthru
      _
    // Predicated region
    $region38: #{autoencoder_linear_forward.1} parent=1 // pred_check
      _
    $region39: #{autoencoder_linear_forward.1} parent=1 // pred_check_branch
      %68 = sbr.rel (0) target = $region41
    $region40: #{autoencoder_linear_forward.1} parent=1 // pred_region
      %70 = dma.done [#allocation3], 12544
    $region41: #{autoencoder_linear_forward.1} parent=1 // pred_fallthru
      _
    // Predicated region
    $region42: #{autoencoder_linear_forward.1} parent=1 // pred_check
      _
    $region43: #{autoencoder_linear_forward.1} parent=1 // pred_check_branch
      %72 = sbr.rel (0) target = $region45
    $region44: #{autoencoder_linear_forward.1} parent=1 // pred_region
      %74 = dma.done [#allocation5], 2048
    $region45: #{autoencoder_linear_forward.1} parent=1 // pred_fallthru
      _
    // Predicated region
    $region46: #{autoencoder_linear_forward.1} parent=1 // pred_check
      _
    $region47: #{autoencoder_linear_forward.1} parent=1 // pred_check_branch
      %76 = sbr.rel (0) target = $region49
    $region48: #{autoencoder_linear_forward.1} parent=1 // pred_region
      %78 = dma.done [#allocation5], 2048
    $region49: #{autoencoder_linear_forward.1} parent=1 // pred_fallthru
      _
    %v79 = vld [vmem:[%s0] sm:$0xff]
    %v80 = vld [vmem:[%s0 + $0x8] sm:$0xff]
    %v81 = vld [vmem:[%s0 + $0x10] sm:$0xff]
    %v82 = vld [vmem:[%s0 + $0x18] sm:$0xff]
    %v83 = vld [vmem:[%s0 + $0x20] sm:$0xff]
    %v84 = vld [vmem:[%s0 + $0x28] sm:$0xff]
    %v85 = vld [vmem:[%s0 + $0x30] sm:$0xff]
    %v86 = vld [vmem:[%s0 + $0x38] sm:$0xff]
    %v87 = vld [vmem:[%s0 + $0x40] sm:$0xff]
    %v88 = vld [vmem:[%s0 + $0x48] sm:$0xff]
    %v89 = vld [vmem:[%s0 + $0x50] sm:$0xff]
    %v90 = vld [vmem:[%s0 + $0x58] sm:$0xff]
    %v91 = vld [vmem:[%s0 + $0x60] sm:$0xff]
    %v92 = vld [vmem:[%s0 + $0x68] sm:$0xff]
    %v93 = vld [vmem:[#allocation2] sm:$0xff]
    %v94 = vld [vmem:[#allocation2 + $0x8] sm:$0xff]
    %v95 = vld [vmem:[#allocation2 + $0x10] sm:$0xff]
    %v96 = vld [vmem:[#allocation2 + $0x18] sm:$0xff]
    %v97 = vld [vmem:[#allocation2 + $0x20] sm:$0xff]
    %v98 = vld [vmem:[#allocation2 + $0x28] sm:$0xff]
    %v99 = vld [vmem:[#allocation2 + $0x30] sm:$0xff]
    %v100 = vld [vmem:[#allocation2 + $0x38] sm:$0xff]
    %v101 = vld [vmem:[#allocation2 + $0x40] sm:$0xff]
    %v102 = vld [vmem:[#allocation2 + $0x48] sm:$0xff]
    %v103 = vld [vmem:[#allocation2 + $0x50] sm:$0xff]
    %v104 = vld [vmem:[#allocation2 + $0x58] sm:$0xff]
    %v105 = vld [vmem:[#allocation2 + $0x60] sm:$0xff]
    %v106 = vld [vmem:[#allocation2 + $0x68] sm:$0xff]
    %v107 = vld [vmem:[#allocation2 + $0x70] sm:$0xff]
    %v108 = vld [vmem:[#allocation2 + $0x78] sm:$0xff]
    %v109 = vld [vmem:[#allocation2 + $0x80] sm:$0xff]
    %v110 = vld [vmem:[#allocation2 + $0x88] sm:$0xff]
    %v111 = vld [vmem:[#allocation2 + $0x90] sm:$0xff]
    %v112 = vld [vmem:[#allocation2 + $0x98] sm:$0xff]
    %v113 = vld [vmem:[#allocation2 + $0xa0] sm:$0xff]
    %v114 = vld [vmem:[#allocation2 + $0xa8] sm:$0xff]
    %v115 = vld [vmem:[#allocation2 + $0xb0] sm:$0xff]
    %v116 = vld [vmem:[#allocation2 + $0xb8] sm:$0xff]
    %v117 = vld [vmem:[#allocation2 + $0xc0] sm:$0xff]
    %v118 = vld [vmem:[#allocation2 + $0xc8] sm:$0xff]
    %v119 = vld [vmem:[#allocation2 + $0xd0] sm:$0xff]
    %v120 = vld [vmem:[#allocation2 + $0xd8] sm:$0xff]
    %v121 = vld [vmem:[#allocation2 + $0xe0] sm:$0xff]
    %v122 = vld [vmem:[#allocation2 + $0xe8] sm:$0xff]
    %v123 = vld [vmem:[#allocation2 + $0xf0] sm:$0xff]
    %v124 = vld [vmem:[#allocation2 + $0xf8] sm:$0xff]
    %v125 = vld [vmem:[#allocation2 + $0x100] sm:$0xff]
    %v126 = vld [vmem:[#allocation2 + $0x108] sm:$0xff]
    %v127 = vld [vmem:[#allocation2 + $0x110] sm:$0xff]
    %v128 = vld [vmem:[#allocation2 + $0x118] sm:$0xff]
    %v129 = vld [vmem:[#allocation2 + $0x120] sm:$0xff]
    %v130 = vld [vmem:[#allocation2 + $0x128] sm:$0xff]
    %v131 = vld [vmem:[#allocation2 + $0x130] sm:$0xff]
    %v132 = vld [vmem:[#allocation2 + $0x138] sm:$0xff]
    %v133 = vld [vmem:[#allocation2 + $0x140] sm:$0xff]
    %v134 = vld [vmem:[#allocation2 + $0x148] sm:$0xff]
    %v135 = vld [vmem:[#allocation2 + $0x150] sm:$0xff]
    %v136 = vld [vmem:[#allocation2 + $0x158] sm:$0xff]
    %v137 = vld [vmem:[#allocation2 + $0x160] sm:$0xff]
    %v138 = vld [vmem:[#allocation2 + $0x168] sm:$0xff]
    %v139 = vld [vmem:[#allocation2 + $0x170] sm:$0xff]
    %v140 = vld [vmem:[#allocation2 + $0x178] sm:$0xff]
    %v141 = vld [vmem:[#allocation2 + $0x180] sm:$0xff]
    %v142 = vld [vmem:[#allocation2 + $0x188] sm:$0xff]
    %v143 = vld [vmem:[#allocation2 + $0x190] sm:$0xff]
    %v144 = vld [vmem:[#allocation2 + $0x198] sm:$0xff]
    %v145 = vld [vmem:[#allocation2 + $0x1a0] sm:$0xff]
    %v146 = vld [vmem:[#allocation2 + $0x1a8] sm:$0xff]
    %v147 = vld [vmem:[#allocation2 + $0x1b0] sm:$0xff]
    %v148 = vld [vmem:[#allocation2 + $0x1b8] sm:$0xff]
    %v149 = vld [vmem:[#allocation2 + $0x1c0] sm:$0xff]
    %v150 = vld [vmem:[#allocation2 + $0x1c8] sm:$0xff]
    %v151 = vld [vmem:[#allocation2 + $0x1d0] sm:$0xff]
    %v152 = vld [vmem:[#allocation2 + $0x1d8] sm:$0xff]
    %v153 = vld [vmem:[#allocation2 + $0x1e0] sm:$0xff]
    %v154 = vld [vmem:[#allocation2 + $0x1e8] sm:$0xff]
    %v155 = vld [vmem:[#allocation2 + $0x1f0] sm:$0xff]
    %v156 = vld [vmem:[#allocation2 + $0x1f8] sm:$0xff]
    %v157 = vld [vmem:[#allocation2 + $0x200] sm:$0xff]
    %v158 = vld [vmem:[#allocation2 + $0x208] sm:$0xff]
    %v159 = vld [vmem:[#allocation2 + $0x210] sm:$0xff]
    %v160 = vld [vmem:[#allocation2 + $0x218] sm:$0xff]
    %v161 = vld [vmem:[#allocation2 + $0x220] sm:$0xff]
    %v162 = vld [vmem:[#allocation2 + $0x228] sm:$0xff]
    %v163 = vld [vmem:[#allocation2 + $0x230] sm:$0xff]
    %v164 = vld [vmem:[#allocation2 + $0x238] sm:$0xff]
    %v165 = vld [vmem:[#allocation2 + $0x240] sm:$0xff]
    %v166 = vld [vmem:[#allocation2 + $0x248] sm:$0xff]
    %v167 = vld [vmem:[#allocation2 + $0x250] sm:$0xff]
    %v168 = vld [vmem:[#allocation2 + $0x258] sm:$0xff]
    %v169 = vld [vmem:[#allocation2 + $0x260] sm:$0xff]
    %v170 = vld [vmem:[#allocation2 + $0x268] sm:$0xff]
    %v171 = vld [vmem:[#allocation2 + $0x270] sm:$0xff]
    %v172 = vld [vmem:[#allocation2 + $0x278] sm:$0xff]
    %v173 = vld [vmem:[#allocation2 + $0x280] sm:$0xff]
    %v174 = vld [vmem:[#allocation2 + $0x288] sm:$0xff]
    %v175 = vld [vmem:[#allocation2 + $0x290] sm:$0xff]
    %v176 = vld [vmem:[#allocation2 + $0x298] sm:$0xff]
    %v177 = vld [vmem:[#allocation2 + $0x2a0] sm:$0xff]
    %v178 = vld [vmem:[#allocation2 + $0x2a8] sm:$0xff]
    %v179 = vld [vmem:[#allocation2 + $0x2b0] sm:$0xff]
    %v180 = vld [vmem:[#allocation2 + $0x2b8] sm:$0xff]
    %v181 = vld [vmem:[#allocation2 + $0x2c0] sm:$0xff]
    %v182 = vld [vmem:[#allocation2 + $0x2c8] sm:$0xff]
    %v183 = vld [vmem:[#allocation2 + $0x2d0] sm:$0xff]
    %v184 = vld [vmem:[#allocation2 + $0x2d8] sm:$0xff]
    %v185 = vld [vmem:[#allocation2 + $0x2e0] sm:$0xff]
    %v186 = vld [vmem:[#allocation2 + $0x2e8] sm:$0xff]
    %v187 = vld [vmem:[#allocation2 + $0x2f0] sm:$0xff]
    %v188 = vld [vmem:[#allocation2 + $0x2f8] sm:$0xff]
    %v189 = vld [vmem:[#allocation2 + $0x300] sm:$0xff]
    %v190 = vld [vmem:[#allocation2 + $0x308] sm:$0xff]
    %v191 = vld [vmem:[%s2] sm:$0x1]
    %v193 = vperm.slane %v191, 0
    %vm195 = vcmask 130048
    %v197 = vsel %vm195, %v85, 0
    %v200 = vsel %vm195, %v92, 0
    %202 = vmatpush.msra.mxu0 %v108
    %203 = vmatpush.msra.mxu0 %v107
    %204 = vmatpush.msra.mxu0 %v106
    %205 = vmatpush.msra.mxu0 %v105
    %206 = vmatpush.msra.mxu0 %v104
    %207 = vmatpush.msra.mxu0 %v103
    %208 = vmatpush.msra.mxu0 %v102
    %209 = vmatpush.msra.mxu0 %v101
    %210 = vmatpush.msra.mxu0 %v100
    %211 = vmatpush.msra.mxu0 %v99
    %212 = vmatpush.msra.mxu0 %v98
    %213 = vmatpush.msra.mxu0 %v97
    %214 = vmatpush.msra.mxu0 %v96
    %215 = vmatpush.msra.mxu0 %v95
    %216 = vmatpush.msra.mxu0 %v94
    %217 = vmatpush.msra.mxu0 %v93
    %218 = vmatmul.f32.gmra.mxu0 %v79
    %v219 = vpop.f32.mrf.mxu0
    %v220 = vadd.f32 %v193, %v219
    %221 = vmatmul.f32.gmra.mxu0 %v86
    %v222 = vpop.f32.mrf.mxu0
    %v223 = vadd.f32 %v193, %v222
    %224 = vdwg.mxu0
    %225 = vmatpush.msra.mxu0 %v124
    %226 = vmatpush.msra.mxu0 %v123
    %227 = vmatpush.msra.mxu0 %v122
    %228 = vmatpush.msra.mxu0 %v121
    %229 = vmatpush.msra.mxu0 %v120
    %230 = vmatpush.msra.mxu0 %v119
    %231 = vmatpush.msra.mxu0 %v118
    %232 = vmatpush.msra.mxu0 %v117
    %233 = vmatpush.msra.mxu0 %v116
    %234 = vmatpush.msra.mxu0 %v115
    %235 = vmatpush.msra.mxu0 %v114
    %236 = vmatpush.msra.mxu0 %v113
    %237 = vmatpush.msra.mxu0 %v112
    %238 = vmatpush.msra.mxu0 %v111
    %239 = vmatpush.msra.mxu0 %v110
    %240 = vmatpush.msra.mxu0 %v109
    %241 = vmatmul.f32.gmra.mxu0 %v80
    %v242 = vpop.f32.mrf.mxu0
    %v243 = vadd.f32 %v220, %v242
    %244 = vmatmul.f32.gmra.mxu0 %v87
    %v245 = vpop.f32.mrf.mxu0
    %v246 = vadd.f32 %v223, %v245
    %247 = vdwg.mxu0
    %248 = vmatpush.msra.mxu0 %v140
    %249 = vmatpush.msra.mxu0 %v139
    %250 = vmatpush.msra.mxu0 %v138
    %251 = vmatpush.msra.mxu0 %v137
    %252 = vmatpush.msra.mxu0 %v136
    %253 = vmatpush.msra.mxu0 %v135
    %254 = vmatpush.msra.mxu0 %v134
    %255 = vmatpush.msra.mxu0 %v133
    %256 = vmatpush.msra.mxu0 %v132
    %257 = vmatpush.msra.mxu0 %v131
    %258 = vmatpush.msra.mxu0 %v130
    %259 = vmatpush.msra.mxu0 %v129
    %260 = vmatpush.msra.mxu0 %v128
    %261 = vmatpush.msra.mxu0 %v127
    %262 = vmatpush.msra.mxu0 %v126
    %263 = vmatpush.msra.mxu0 %v125
    %264 = vmatmul.f32.gmra.mxu0 %v81
    %v265 = vpop.f32.mrf.mxu0
    %v266 = vadd.f32 %v243, %v265
    %267 = vmatmul.f32.gmra.mxu0 %v88
    %v268 = vpop.f32.mrf.mxu0
    %v269 = vadd.f32 %v246, %v268
    %270 = vdwg.mxu0
    %271 = vmatpush.msra.mxu0 %v156
    %272 = vmatpush.msra.mxu0 %v155
    %273 = vmatpush.msra.mxu0 %v154
    %274 = vmatpush.msra.mxu0 %v153
    %275 = vmatpush.msra.mxu0 %v152
    %276 = vmatpush.msra.mxu0 %v151
    %277 = vmatpush.msra.mxu0 %v150
    %278 = vmatpush.msra.mxu0 %v149
    %279 = vmatpush.msra.mxu0 %v148
    %280 = vmatpush.msra.mxu0 %v147
    %281 = vmatpush.msra.mxu0 %v146
    %282 = vmatpush.msra.mxu0 %v145
    %283 = vmatpush.msra.mxu0 %v144
    %284 = vmatpush.msra.mxu0 %v143
    %285 = vmatpush.msra.mxu0 %v142
    %286 = vmatpush.msra.mxu0 %v141
    %287 = vmatmul.f32.gmra.mxu0 %v82
    %v288 = vpop.f32.mrf.mxu0
    %v289 = vadd.f32 %v266, %v288
    %290 = vmatmul.f32.gmra.mxu0 %v89
    %v291 = vpop.f32.mrf.mxu0
    %v292 = vadd.f32 %v269, %v291
    %293 = vdwg.mxu0
    %294 = vmatpush.msra.mxu0 %v172
    %295 = vmatpush.msra.mxu0 %v171
    %296 = vmatpush.msra.mxu0 %v170
    %297 = vmatpush.msra.mxu0 %v169
    %298 = vmatpush.msra.mxu0 %v168
    %299 = vmatpush.msra.mxu0 %v167
    %300 = vmatpush.msra.mxu0 %v166
    %301 = vmatpush.msra.mxu0 %v165
    %302 = vmatpush.msra.mxu0 %v164
    %303 = vmatpush.msra.mxu0 %v163
    %304 = vmatpush.msra.mxu0 %v162
    %305 = vmatpush.msra.mxu0 %v161
    %306 = vmatpush.msra.mxu0 %v160
    %307 = vmatpush.msra.mxu0 %v159
    %308 = vmatpush.msra.mxu0 %v158
    %309 = vmatpush.msra.mxu0 %v157
    %310 = vmatmul.f32.gmra.mxu0 %v83
    %v311 = vpop.f32.mrf.mxu0
    %v312 = vadd.f32 %v289, %v311
    %313 = vmatmul.f32.gmra.mxu0 %v90
    %v314 = vpop.f32.mrf.mxu0
    %v315 = vadd.f32 %v292, %v314
    %316 = vdwg.mxu0
    %317 = vmatpush.msra.mxu0 %v188
    %318 = vmatpush.msra.mxu0 %v187
    %319 = vmatpush.msra.mxu0 %v186
    %320 = vmatpush.msra.mxu0 %v185
    %321 = vmatpush.msra.mxu0 %v184
    %322 = vmatpush.msra.mxu0 %v183
    %323 = vmatpush.msra.mxu0 %v182
    %324 = vmatpush.msra.mxu0 %v181
    %325 = vmatpush.msra.mxu0 %v180
    %326 = vmatpush.msra.mxu0 %v179
    %327 = vmatpush.msra.mxu0 %v178
    %328 = vmatpush.msra.mxu0 %v177
    %329 = vmatpush.msra.mxu0 %v176
    %330 = vmatpush.msra.mxu0 %v175
    %331 = vmatpush.msra.mxu0 %v174
    %332 = vmatpush.msra.mxu0 %v173
    %333 = vmatmul.f32.gmra.mxu0 %v84
    %v334 = vpop.f32.mrf.mxu0
    %v335 = vadd.f32 %v312, %v334
    %336 = vmatmul.f32.gmra.mxu0 %v91
    %v337 = vpop.f32.mrf.mxu0
    %v338 = vadd.f32 %v315, %v337
    %339 = vdwg.mxu0
    %340 = vmatpush.msra.mxu0 0.0
    %341 = vmatpush.msra.mxu0 0.0
    %342 = vmatpush.msra.mxu0 0.0
    %343 = vmatpush.msra.mxu0 0.0
    %344 = vmatpush.msra.mxu0 0.0
    %345 = vmatpush.msra.mxu0 0.0
    %346 = vmatpush.msra.mxu0 0.0
    %347 = vmatpush.msra.mxu0 0.0
    %348 = vmatpush.msra.mxu0 0.0
    %349 = vmatpush.msra.mxu0 0.0
    %350 = vmatpush.msra.mxu0 0.0
    %351 = vmatpush.msra.mxu0 0.0
    %352 = vmatpush.msra.mxu0 0.0
    %353 = vmatpush.msra.mxu0 0.0
    %354 = vmatpush.msra.mxu0 %v190
    %355 = vmatpush.msra.mxu0 %v189
    %356 = vmatmul.f32.gmra.mxu0 %v197
    %v357 = vpop.f32.mrf.mxu0
    %v358 = vadd.f32 %v335, %v357
    %359 = vmatmul.f32.gmra.mxu0 %v200
    %v360 = vpop.f32.mrf.mxu0
    %v361 = vadd.f32 %v338, %v360
    %362 = vdwg.mxu0
    %v363 = vmax.f32 %v358, 0.0
    %v364 = vmax.f32 %v361, 0.0
    %v365 = vld [vmem:[%s3] sm:$0xff]
    %v366 = vld [vmem:[%s3 + $0x8] sm:$0xff]
    %v367 = vld [vmem:[%s3 + $0x10] sm:$0xff]
    %v368 = vld [vmem:[%s3 + $0x18] sm:$0xff]
    %v369 = vld [vmem:[%s3 + $0x20] sm:$0xff]
    %v370 = vld [vmem:[%s3 + $0x28] sm:$0xff]
    %v371 = vld [vmem:[%s3 + $0x30] sm:$0xff]
    %v372 = vld [vmem:[%s3 + $0x38] sm:$0xff]
    %v373 = vld [vmem:[%s3 + $0x40] sm:$0xff]
    %v374 = vld [vmem:[%s3 + $0x48] sm:$0xff]
    %v375 = vld [vmem:[%s3 + $0x50] sm:$0xff]
    %v376 = vld [vmem:[%s3 + $0x58] sm:$0xff]
    %v377 = vld [vmem:[%s3 + $0x60] sm:$0xff]
    %v378 = vld [vmem:[%s3 + $0x68] sm:$0xff]
    %v379 = vld [vmem:[%s3 + $0x70] sm:$0xff]
    %v380 = vld [vmem:[%s3 + $0x78] sm:$0xff]
    %v381 = vld [vmem:[%s4] sm:$0x1]
    %v383 = vperm.slane %v381, 0
    %385 = vmatpush.msra.mxu0 %v380
    %386 = vmatpush.msra.mxu0 %v379
    %387 = vmatpush.msra.mxu0 %v378
    %388 = vmatpush.msra.mxu0 %v377
    %389 = vmatpush.msra.mxu0 %v376
    %390 = vmatpush.msra.mxu0 %v375
    %391 = vmatpush.msra.mxu0 %v374
    %392 = vmatpush.msra.mxu0 %v373
    %393 = vmatpush.msra.mxu0 %v372
    %394 = vmatpush.msra.mxu0 %v371
    %395 = vmatpush.msra.mxu0 %v370
    %396 = vmatpush.msra.mxu0 %v369
    %397 = vmatpush.msra.mxu0 %v368
    %398 = vmatpush.msra.mxu0 %v367
    %399 = vmatpush.msra.mxu0 %v366
    %400 = vmatpush.msra.mxu0 %v365
    %401 = vmatmul.f32.gmra.mxu0 %v363
    %v402 = vpop.f32.mrf.mxu0
    %v403 = vadd.f32 %v383, %v402
    %404 = vmatmul.f32.gmra.mxu0 %v364
    %v405 = vpop.f32.mrf.mxu0
    %v406 = vadd.f32 %v383, %v405
    %407 = vdwg.mxu0
    %v408 = vmax.f32 %v403, 0.0
    %v409 = vmax.f32 %v406, 0.0
    %v410 = vld [vmem:[#allocation4] sm:$0xff]
    %v411 = vld [vmem:[#allocation4 + $0x8] sm:$0xff]
    %v412 = vld [vmem:[#allocation4 + $0x10] sm:$0xff]
    %v413 = vld [vmem:[#allocation4 + $0x18] sm:$0xff]
    %v414 = vld [vmem:[#allocation4 + $0x20] sm:$0xff]
    %v415 = vld [vmem:[#allocation4 + $0x28] sm:$0xff]
    %v416 = vld [vmem:[#allocation4 + $0x30] sm:$0xff]
    %v417 = vld [vmem:[#allocation4 + $0x38] sm:$0xff]
    %v418 = vld [vmem:[#allocation4 + $0x40] sm:$0xff]
    %v419 = vld [vmem:[#allocation4 + $0x48] sm:$0xff]
    %v420 = vld [vmem:[#allocation4 + $0x50] sm:$0xff]
    %v421 = vld [vmem:[#allocation4 + $0x58] sm:$0xff]
    %v422 = vld [vmem:[#allocation4 + $0x60] sm:$0xff]
    %v423 = vld [vmem:[#allocation4 + $0x68] sm:$0xff]
    %v424 = vld [vmem:[#allocation4 + $0x70] sm:$0xff]
    %v425 = vld [vmem:[#allocation4 + $0x78] sm:$0xff]
    %v426 = vld [vmem:[%s6] sm:$0x1]
    %v428 = vperm.slane %v426, 0
    %430 = vmatpush.msra.mxu0 %v425
    %431 = vmatpush.msra.mxu0 %v424
    %432 = vmatpush.msra.mxu0 %v423
    %433 = vmatpush.msra.mxu0 %v422
    %434 = vmatpush.msra.mxu0 %v421
    %435 = vmatpush.msra.mxu0 %v420
    %436 = vmatpush.msra.mxu0 %v419
    %437 = vmatpush.msra.mxu0 %v418
    %438 = vmatpush.msra.mxu0 %v417
    %439 = vmatpush.msra.mxu0 %v416
    %440 = vmatpush.msra.mxu0 %v415
    %441 = vmatpush.msra.mxu0 %v414
    %442 = vmatpush.msra.mxu0 %v413
    %443 = vmatpush.msra.mxu0 %v412
    %444 = vmatpush.msra.mxu0 %v411
    %445 = vmatpush.msra.mxu0 %v410
    %446 = vmatmul.f32.gmra.mxu0 %v408
    %v447 = vpop.f32.mrf.mxu0
    %v448 = vadd.f32 %v428, %v447
    %449 = vmatmul.f32.gmra.mxu0 %v409
    %v450 = vpop.f32.mrf.mxu0
    %v451 = vadd.f32 %v428, %v450
    %452 = vdwg.mxu0
    %v453 = vmax.f32 %v448, 0.0
    %v454 = vmax.f32 %v451, 0.0
    %v455 = vld [vmem:[#allocation6] sm:$0xff]
    %v456 = vld [vmem:[#allocation6 + $0x8] sm:$0xff]
    %v457 = vld [vmem:[#allocation6 + $0x10] sm:$0xff]
    %v458 = vld [vmem:[#allocation6 + $0x18] sm:$0xff]
    %v459 = vld [vmem:[#allocation6 + $0x20] sm:$0xff]
    %v460 = vld [vmem:[#allocation6 + $0x28] sm:$0xff]
    %v461 = vld [vmem:[#allocation6 + $0x30] sm:$0xff]
    %v462 = vld [vmem:[#allocation6 + $0x38] sm:$0xff]
    %v463 = vld [vmem:[#allocation6 + $0x40] sm:$0xff]
    %v464 = vld [vmem:[#allocation6 + $0x48] sm:$0xff]
    %v465 = vld [vmem:[#allocation6 + $0x50] sm:$0xff]
    %v466 = vld [vmem:[#allocation6 + $0x58] sm:$0xff]
    %v467 = vld [vmem:[#allocation6 + $0x60] sm:$0xff]
    %v468 = vld [vmem:[#allocation6 + $0x68] sm:$0xff]
    %v469 = vld [vmem:[#allocation6 + $0x70] sm:$0xff]
    %v470 = vld [vmem:[#allocation6 + $0x78] sm:$0xff]
    %v471 = vld [vmem:[%s8] sm:$0x1]
    %v473 = vperm.slane %v471, 0
    %475 = vmatpush.msra.mxu0 %v470
    %476 = vmatpush.msra.mxu0 %v469
    %477 = vmatpush.msra.mxu0 %v468
    %478 = vmatpush.msra.mxu0 %v467
    %479 = vmatpush.msra.mxu0 %v466
    %480 = vmatpush.msra.mxu0 %v465
    %481 = vmatpush.msra.mxu0 %v464
    %482 = vmatpush.msra.mxu0 %v463
    %483 = vmatpush.msra.mxu0 %v462
    %484 = vmatpush.msra.mxu0 %v461
    %485 = vmatpush.msra.mxu0 %v460
    %486 = vmatpush.msra.mxu0 %v459
    %487 = vmatpush.msra.mxu0 %v458
    %488 = vmatpush.msra.mxu0 %v457
    %489 = vmatpush.msra.mxu0 %v456
    %490 = vmatpush.msra.mxu0 %v455
    %491 = vmatmul.f32.gmra.mxu0 %v453
    %v492 = vpop.f32.mrf.mxu0
    %v493 = vadd.f32 %v473, %v492
    %494 = vmatmul.f32.gmra.mxu0 %v454
    %v495 = vpop.f32.mrf.mxu0
    %v496 = vadd.f32 %v473, %v495
    %497 = vdwg.mxu0
    %v498 = vpack.c.bf16 %v493, %v493
    %v499 = vpack.c.bf16 %v496, %v496
    %500 = vst [vmem:[%s9] sm:$0xf] %v498
    %501 = vst [vmem:[%s9 + $0x4] sm:$0xf] %v499
    // Predicated region
    $region50: #{autoencoder_linear_forward.1} parent=1 // pred_check
      _
    $region51: #{autoencoder_linear_forward.1} parent=1 // pred_check_branch
      %503 = sbr.rel (0) target = $region53
    $region52: #{autoencoder_linear_forward.1} parent=1 // pred_region
      _
    $region53: #{autoencoder_linear_forward.1} parent=1 // pred_fallthru
      _
    // Predicated region
    $region54: #{autoencoder_linear_forward.1} parent=1 // pred_check
      _
    $region55: #{autoencoder_linear_forward.1} parent=1 // pred_check_branch
      %505 = sbr.rel (0) target = $region57
    $region56: #{autoencoder_linear_forward.1} parent=1 // pred_region
      _
    $region57: #{autoencoder_linear_forward.1} parent=1 // pred_fallthru
      _
    %506 = vsyncpa [#allocation3], 1
    %507 = vsyncpa [#allocation5], 1

</llo_original>
